<compile_context>
chip_gen: v6e
topology: v6e:2x2x1
jax: 0.10.0
libtpu: 0.0.40
codegen_flags: <defaults>
</compile_context>

<pallas_src>
import jax
import jax.numpy as jnp
import numpy as np
from jax import lax
from jax.experimental import pallas as pl
from jax.experimental.pallas import tpu as pltpu

EPS = 1e-5


# ---------------------------------------------------------------------------
# Pass 1: fused "concat of 3 dilated convs + maxpool" matmul + BN partial stats
# ---------------------------------------------------------------------------
def _conv_stats_kernel(x_ref, w_ref, y_ref, stats_ref):
    # x_ref : (TILE_R, pack*Kf)  -- `pack` output pixels per row; per pixel the
    #         features are [27*Cin dilated-conv taps, Cin maxpool values].
    # w_ref : (pack*Kf, pack*C)  -- block-diagonal packed weight (identity
    #         block routes the maxpool channels through the same matmul).
    y = jnp.dot(x_ref[...], w_ref[...], preferred_element_type=jnp.float32)
    s = jnp.sum(y, axis=0, keepdims=True)                    # (1, pack*C)
    sq = jnp.sum(y * y, axis=0, keepdims=True)               # (1, pack*C)
    stats_ref[0] = jnp.concatenate([s, sq], axis=0)          # (2, pack*C) f32
    y_ref[...] = y.astype(y_ref.dtype)                       # bf16 in perf cfg


# ---------------------------------------------------------------------------
# Pass 2: y * scale + shift, ReLU.  scale/shift are precomputed in the wrapper.
# ---------------------------------------------------------------------------
def _bn_relu_kernel(scale_ref, shift_ref, y_ref, out_ref):
    y = y_ref[...].astype(jnp.float32)
    out_ref[...] = jnp.maximum(y * scale_ref[...] + shift_ref[...], 0.0)


# ---------------------------------------------------------------------------
# Wrapper
# ---------------------------------------------------------------------------
def _extract_patches(x_nhwc, dilation, ho, wo):
    """3x3 taps at offsets dilation*(k-1) around (2*oy, 2*ox), zero padded.

    Matches Conv2d(k=3, stride=2, padding=dilation, dilation=dilation).
    Returns (N, Ho, Wo, 9*C) with feature order [tap(ky,kx)-major, channel].
    """
    d = dilation
    xp = jnp.pad(x_nhwc, ((0, 0), (d, d), (d, d), (0, 0)))
    taps = []
    for ky in range(3):
        for kx in range(3):
            taps.append(xp[:, d * ky: d * ky + 2 * ho: 2,
                           d * kx: d * kx + 2 * wo: 2, :])
    return jnp.concatenate(taps, axis=-1)


def _round_up(a, m):
    return (a + m - 1) // m * m


def downsample_forward(x_nchw, w_d1, w_d2, w_d5, gamma, beta,
                       *, compute_dtype=jnp.bfloat16, tile_rows_max=1024):
    """x_nchw: (N, Cin, H, W); w_d*: PyTorch OIHW (Cout_i, Cin, 3, 3)."""
    n, cin, h, w = x_nchw.shape
    c1, c2, c3 = w_d1.shape[0], w_d2.shape[0], w_d5.shape[0]
    c_total = c1 + c2 + c3 + cin
    ho, wo = (h - 1) // 2 + 1, (w - 1) // 2 + 1
    p = n * ho * wo
    kf = 27 * cin + cin          # 3 dilations * 9 taps * Cin  +  Cin (maxpool)

    # Lane packing: pack `pack` output pixels into one 128-lane row so output
    # stores are unmasked (C_total=32 -> pack=4, lane width 128).
    pack = 128 // c_total if (c_total <= 128 and 128 % c_total == 0) else 1
    kf_p = pack * kf
    c_p = pack * c_total

    # ---- XLA glue (in compute_dtype): im2col for 3 dilation rates + maxpool.
    # TODO(synk): move this tap gather in-kernel (haloed DMA slab) to kill the
    # remaining im2col read amplification.
    x_nhwc = jnp.transpose(x_nchw, (0, 2, 3, 1)).astype(compute_dtype)
    p1 = _extract_patches(x_nhwc, 1, ho, wo)
    p2 = _extract_patches(x_nhwc, 2, ho, wo)
    p5 = _extract_patches(x_nhwc, 5, ho, wo)
    # MaxPool2d(3, stride=2, padding=1): -inf padding == PyTorch semantics.
    pool = lax.reduce_window(x_nhwc, jnp.asarray(-jnp.inf, x_nhwc.dtype),
                             lax.max, (1, 3, 3, 1), (1, 2, 2, 1),
                             ((0, 0), (1, 1), (1, 1), (0, 0)))
    xf = jnp.concatenate([p1, p2, p5, pool], axis=-1).reshape(p, kf)

    # ---- one block-diagonal weight: whole concat is a single matmul --------
    def _reshape_w(wt):          # OIHW -> (9*Cin, Cout_i), tap-major rows
        return jnp.transpose(wt, (2, 3, 1, 0)).reshape(9 * cin, wt.shape[0])

    wb = jnp.zeros((kf, c_total), jnp.float32)
    wb = wb.at[0:9 * cin, 0:c1].set(_reshape_w(w_d1))
    wb = wb.at[9 * cin:18 * cin, c1:c1 + c2].set(_reshape_w(w_d2))
    wb = wb.at[18 * cin:27 * cin, c1 + c2:c1 + c2 + c3].set(_reshape_w(w_d5))
    wb = wb.at[27 * cin:, c1 + c2 + c3:].set(jnp.eye(cin, dtype=jnp.float32))
    # Pack `pack` pixels per row: block-diagonal replication (NOT K padding —
    # the dominant xf HBM stream is unchanged, it is only reshaped).
    wb_p = jnp.kron(jnp.eye(pack, dtype=jnp.float32), wb).astype(compute_dtype)

    # ---- tile over packed pixel rows ----------------------------------------
    rows = -(-p // pack)                                        # cdiv
    # Cap tile so nt >= 2 when possible (v7x dual-TensorCore "parallel" axis).
    tile_rows = min(tile_rows_max, _round_up(-(-rows // 2), 16))
    rows_padded = _round_up(rows, tile_rows)
    nt = rows_padded // tile_rows
    p_pad = rows_padded * pack
    if p_pad != p:
        # Zero rows: zero conv output, zero stats contribution; sliced off.
        xf = jnp.pad(xf, ((0, p_pad - p), (0, 0)))
    xf_p = xf.reshape(rows_padded, kf_p)                        # free reshape

    y_dtype = compute_dtype      # bf16 intermediate in the perf config
    cparams = pltpu.CompilerParams(dimension_semantics=("parallel",),
                                   vmem_limit_bytes=32 * 1024 * 1024)

    y, stats = pl.pallas_call(
        _conv_stats_kernel,
        out_shape=(jax.ShapeDtypeStruct((rows_padded, c_p), y_dtype),
                   jax.ShapeDtypeStruct((nt, 2, c_p), jnp.float32)),
        grid_spec=pltpu.PrefetchScalarGridSpec(
            num_scalar_prefetch=0,
            grid=(nt,),
            in_specs=[pl.BlockSpec((tile_rows, kf_p), lambda i: (i, 0)),
                      pl.BlockSpec((kf_p, c_p), lambda i: (0, 0))],
            out_specs=[pl.BlockSpec((tile_rows, c_p), lambda i: (i, 0)),
                       pl.BlockSpec((1, 2, c_p), lambda i: (i, 0, 0))]),
        compiler_params=cparams,
    )(xf_p, wb_p)

    # ---- tiny XLA reduction + BN scale/shift precompute ---------------------
    stats_red = jnp.sum(stats, axis=0)                     # (2, pack*C)
    stats_red = stats_red.reshape(2, pack, c_total).sum(axis=1)   # (2, C)
    mean = stats_red[0] / p
    var = jnp.maximum(stats_red[1] / p - mean * mean, 0.0)
    inv_std = lax.rsqrt(var + EPS)
    scale = gamma.astype(jnp.float32) * inv_std            # (C,)
    shift = beta.astype(jnp.float32) - mean * scale        # (C,)
    scale_p = jnp.tile(scale, pack).reshape(1, c_p)
    shift_p = jnp.tile(shift, pack).reshape(1, c_p)

    out_rows = pl.pallas_call(
        _bn_relu_kernel,
        out_shape=jax.ShapeDtypeStruct((rows_padded, c_p), jnp.float32),
        grid_spec=pltpu.PrefetchScalarGridSpec(
            num_scalar_prefetch=0,
            grid=(nt,),
            in_specs=[pl.BlockSpec((1, c_p), lambda i: (0, 0)),
                      pl.BlockSpec((1, c_p), lambda i: (0, 0)),
                      pl.BlockSpec((tile_rows, c_p), lambda i: (i, 0))],
            out_specs=pl.BlockSpec((tile_rows, c_p), lambda i: (i, 0))),
        compiler_params=cparams,
    )(scale_p, shift_p, y)

    out = out_rows.reshape(p_pad, c_total)[:p].reshape(n, ho, wo, c_total)
    return jnp.transpose(out, (0, 3, 1, 2))                # NCHW


# ---------------------------------------------------------------------------
# Pure-JAX reference (PyTorch semantics)
# ---------------------------------------------------------------------------
def reference(x_nchw, w_d1, w_d2, w_d5, gamma, beta):
    def dconv(wt, d):
        return lax.conv_general_dilated(
            x_nchw, wt, window_strides=(2, 2),
            padding=((d, d), (d, d)), rhs_dilation=(d, d),
            dimension_numbers=("NCHW", "OIHW", "NCHW"))

    pool = lax.reduce_window(x_nchw, -jnp.inf, lax.max,
                             (1, 1, 3, 3), (1, 1, 2, 2),
                             ((0, 0), (0, 0), (1, 1), (1, 1)))
    y = jnp.concatenate([dconv(w_d1, 1), dconv(w_d2, 2), dconv(w_d5, 5), pool],
                        axis=1)
    mean = y.mean(axis=(0, 2, 3), keepdims=True)
    var = ((y - mean) ** 2).mean(axis=(0, 2, 3), keepdims=True)
    y = (y - mean) * lax.rsqrt(var + EPS)
    y = y * gamma[None, :, None, None] + beta[None, :, None, None]
    return jnp.maximum(y, 0.0)


if __name__ == "__main__":
    key = jax.random.PRNGKey(0)
    k1, k2, k3, k4, k5, k6 = jax.random.split(key, 6)

    # in_channels=3 so 11 + 9 + 9 + 3 == 32 == BatchNorm2d(out_channels=32).
    N, Cin, H, W = 2, 3, 16, 16
    div = (11, 9, 9)
    C_total = sum(div) + Cin

    x = jax.random.normal(k1, (N, Cin, H, W), jnp.float32)
    w_d1 = 0.1 * jax.random.normal(k2, (div[0], Cin, 3, 3), jnp.float32)
    w_d2 = 0.1 * jax.random.normal(k3, (div[1], Cin, 3, 3), jnp.float32)
    w_d5 = 0.1 * jax.random.normal(k4, (div[2], Cin, 3, 3), jnp.float32)
    gamma = 1.0 + 0.1 * jax.random.normal(k5, (C_total,), jnp.float32)
    beta = 0.1 * jax.random.normal(k6, (C_total,), jnp.float32)

    ref = reference(x, w_d1, w_d2, w_d5, gamma, beta)

    # f32 path: exact algorithmic check.
    out_f32 = downsample_forward(x, w_d1, w_d2, w_d5, gamma, beta,
                                 compute_dtype=jnp.float32)
    jax.block_until_ready(out_f32)
    np.testing.assert_allclose(np.asarray(out_f32), np.asarray(ref),
                               rtol=1e-3, atol=1e-3)

    # bf16 path (default / perf config): inputs + y intermediate in bf16 with
    # f32 matmul accumulation and f32 stats; looser tolerance.
    out_bf16 = downsample_forward(x, w_d1, w_d2, w_d5, gamma, beta,
                                  compute_dtype=jnp.bfloat16)
    jax.block_until_ready(out_bf16)
    np.testing.assert_allclose(np.asarray(out_bf16), np.asarray(ref),
                               rtol=5e-2, atol=5e-2)

    assert out_f32.shape == (N, C_total, H // 2, W // 2)
    print("KERNEL_OK")
</pallas_src>

<mosaic_0001>
module attributes {stable_mosaic.version = 11 : i64} {
  func.func @_conv_stats_kernel(%arg0: i32, %arg1: memref<16x336xf32, #tpu.memory_space<vmem>>, %arg2: memref<336x128xf32, #tpu.memory_space<vmem>>, %arg3: memref<16x128xf32, #tpu.memory_space<vmem>>, %arg4: memref<1x2x128xf32, #tpu.memory_space<vmem>>) attributes {dimension_semantics = [#tpu.dimension_semantics<parallel>], iteration_bounds = array<i64: 2>, scalar_prefetch = 0 : i64, scratch_operands = 0 : i64, tpu.core_type = #tpu.core_type<tc>, window_params = [{transform_indices = @transform_0, window_bounds = array<i64: 16, 336>}, {pipeline_mode = #tpu.pipeline_mode<synchronous>, transform_indices = @transform_1, window_bounds = array<i64: 336, 128>}, {transform_indices = @transform_2, window_bounds = array<i64: 16, 128>}, {transform_indices = @transform_3, window_bounds = array<i64: 1, 2, 128>}]} {
    %c0 = arith.constant 0 : index
    %c0_0 = arith.constant 0 : index
    %0 = vector.load %arg1[%c0, %c0_0] : memref<16x336xf32, #tpu.memory_space<vmem>>, vector<16x336xf32>
    %c0_1 = arith.constant 0 : index
    %c0_2 = arith.constant 0 : index
    %1 = vector.load %arg2[%c0_1, %c0_2] : memref<336x128xf32, #tpu.memory_space<vmem>>, vector<336x128xf32>
    %cst = arith.constant dense<0.000000e+00> : vector<16x128xf32>
    %2 = tpu.matmul %0, %1, %cst {dimension_numbers = #tpu.dot_dimension_numbers<[1], [0], [0], [1], [0, 0, 1, 1], [], []>} : vector<16x336xf32>, vector<336x128xf32>, vector<16x128xf32> -> vector<16x128xf32>
    %cst_3 = arith.constant dense<0.000000e+00> : vector<128xf32>
    %3 = vector.multi_reduction <add>, %2, %cst_3 [0] : vector<16x128xf32> to vector<128xf32>
    %4 = vector.shape_cast %3 : vector<128xf32> to vector<1x128xf32>
    %5 = arith.mulf %2, %2 : vector<16x128xf32>
    %cst_4 = arith.constant dense<0.000000e+00> : vector<128xf32>
    %6 = vector.multi_reduction <add>, %5, %cst_4 [0] : vector<16x128xf32> to vector<128xf32>
    %7 = vector.shape_cast %6 : vector<128xf32> to vector<1x128xf32>
    %8 = tpu.concatenate %4, %7 in 0 : vector<1x128xf32>, vector<1x128xf32> -> vector<2x128xf32>
    %c0_5 = arith.constant 0 : index
    %c0_6 = arith.constant 0 : index
    %c0_7 = arith.constant 0 : index
    %9 = vector.load %arg4[%c0_5, %c0_6, %c0_7] : memref<1x2x128xf32, #tpu.memory_space<vmem>>, vector<1x2x128xf32>
    %10 = vector.shape_cast %9 : vector<1x2x128xf32> to vector<2x128xf32>
    %11 = vector.shape_cast %8 : vector<2x128xf32> to vector<1x2x128xf32>
    tpu.vector_store %arg4[%c0_5, %c0_6, %c0_7], %11 {strides = array<i32>} : memref<1x2x128xf32, #tpu.memory_space<vmem>>, vector<1x2x128xf32>,
    %c0_8 = arith.constant 0 : index
    %c0_9 = arith.constant 0 : index
    %12 = vector.load %arg3[%c0_8, %c0_9] : memref<16x128xf32, #tpu.memory_space<vmem>>, vector<16x128xf32>
    tpu.vector_store %arg3[%c0_8, %c0_9], %2 {strides = array<i32>} : memref<16x128xf32, #tpu.memory_space<vmem>>, vector<16x128xf32>,
    return
  }
  func.func @transform_0(%arg0: i32) -> (i32, i32) {
    %c0_i32 = arith.constant 0 : i32
    %c0_i32_0 = arith.constant 0 : i32
    return %arg0, %c0_i32 : i32, i32
  }
  func.func @transform_1(%arg0: i32) -> (i32, i32) {
    %c0_i32 = arith.constant 0 : i32
    %c0_i32_0 = arith.constant 0 : i32
    %c0_i32_1 = arith.constant 0 : i32
    return %c0_i32, %c0_i32_0 : i32, i32
  }
  func.func @transform_2(%arg0: i32) -> (i32, i32) {
    %c0_i32 = arith.constant 0 : i32
    %c0_i32_0 = arith.constant 0 : i32
    return %arg0, %c0_i32 : i32, i32
  }
  func.func @transform_3(%arg0: i32) -> (i32, i32, i32) {
    %c0_i32 = arith.constant 0 : i32
    %c0_i32_0 = arith.constant 0 : i32
    %c0_i32_1 = arith.constant 0 : i32
    return %arg0, %c0_i32, %c0_i32_0 : i32, i32, i32
  }
}

</mosaic_0001>

<llo_original>
// kernel: tpu_custom_call.1
$region0: #{tpu_custom_call.1}
  #allocation0 [shape = 'u32[]', space=smem, size = 0x4, offset = 0x4, fixed_abs, tag = 'smem constant byte address 0x4 - core index']
  #allocation1 [shape = 'u32[144,128]{1,0:T(1,128)}', space=vmem, size = 0x12000, scoped, tag = 'internal scratch']
  %s0 = inlined_call_operand.hbm [shape: f32[32,336], index: 0, kind: input, shape index: {}]
  %s1 = inlined_call_operand.hbm [shape: f32[336,128], index: 1, kind: input, shape index: {}]
  %s2 = inlined_call_operand.hbm [shape: f32[32,128], index: 2, kind: output, shape index: {0}]
  %s3 = inlined_call_operand.hbm [shape: f32[2,2,128], index: 3, kind: output, shape index: {1}]
  %4 = xla_tuple %s2, %s3
  %s5 = sld [smem:[#allocation0]]
  $region57: #{tpu_custom_call.1} parent=0
    _
  %s7 = ssub.s32 1, %s5
  %s8 = scalar_select 0, %s7, %s5
  $region1: #{tpu_custom_call.1} parent=0
    #allocation2 [shape = 'u8[49152]{0}', space=vmem, size = 0xc000, scoped, tag = 'input window, operand 0']
    #allocation3 [shape = 's32[2]{0}', space=sflag, size = 0x8, scoped, tag = 'scoped memory for tpu_custom_call.1']
    #allocation4 [shape = 's32[2]{0}', space=sflag, size = 0x8, scoped, tag = 'scoped memory for tpu_custom_call.1']
    #allocation5 [shape = 'u8[172032]{0}', space=vmem, size = 0x2a000, scoped, tag = 'input window, operand 1, single buffered']
    #allocation6 [shape = 's32[1]{0}', space=sflag, size = 0x4, scoped, tag = 'scoped memory for tpu_custom_call.1']
    #allocation7 [shape = 'u8[16384]{0}', space=vmem, size = 0x4000, scoped, tag = 'output window, operand 0']
    #allocation8 [shape = 'u8[2048]{0}', space=vmem, size = 0x800, scoped, tag = 'output window, operand 1']
    #allocation9 [shape = 's32[2]{0}', space=sflag, size = 0x8, scoped, tag = 'scoped memory for tpu_custom_call.1']
    %9 = vsyncpa [#allocation3], 0
    %s10 = scalar_lea.sflag [#allocation3], 1
    %11 = vsyncpa %s10, 0
    %12 = vsyncpa [#allocation6], 0
    %13 = vsyncpa [#allocation4], 0
    %s14 = scalar_lea.sflag [#allocation4], 1
    %15 = vsyncpa %s14, 0
    %16 = vsyncpa [#allocation9], 0
    %s17 = scalar_lea.sflag [#allocation9], 1
    %18 = vsyncpa %s17, 0
    loop: start=0, step=1, limit=4
    $region2: #{tpu_custom_call.1} parent=1 // loop_pre_header
      _
    $region3: #{tpu_custom_call.1} parent=1 // loop_header
      %s20 = sphi 0, %s24
      %p21 = scmp.ge.s32.totalorder %s20, 4
      %s30 = sphi 0, %s32
      %s33 = sphi 0, %s30
      %s34 = sphi 0, %s33
      %s50 = sphi 0, %s34
      %s54 = sphi 0, %s54
      %s56 = sphi 0, %s54
      %s57 = sphi 0, %s56
      %s71 = sphi 0, %s57
      %s77 = sphi 0, %s79
      %s80 = sphi 0, %s77
      %s81 = sphi 0, %s80
      %s97 = sphi 0, %s81
      %s103 = sphi 0, %s105
      %s106 = sphi 0, %s103
      %s107 = sphi 0, %s106
      %s123 = sphi 0, %s107
    $region4: #{tpu_custom_call.1} parent=1 // loop_header_branch
      %23 = sbr.rel (%p21) target = $region8
    $region5: #{tpu_custom_call.1} parent=1 // loop_body
      %s25 = ssub.s32 %s20, 1
      %s26 = ssub.s32 %s20, 2
      %s27 = sadd.s32 %s20, 1
      %s28 = ssub.s32 %s20, %s27
      %p29 = scmp.eq.s32.totalorder %s28, 0
      %s31 = sadd.s32 %s30, 1
      %s32 = scalar_select %p29, %s30, %s31
      %p35 = pneg %p29
      %p36 = scmp.eq.s32.totalorder %s20, 1
      %p37 = por %p35, %p36
      %p38 = scmp.ne.s32.totalorder %s30, %s33
      %p39 = scmp.eq.s32.totalorder %s20, 0
      %p40 = por %p38, %p39
      %p41 = scmp.ne.s32.totalorder %s30, %s33
      %p42 = scmp.eq.s32.totalorder %s25, 1
      %p43 = por %p41, %p42
      %p44 = scmp.ne.s32.totalorder %s33, %s34
      %p45 = scmp.eq.s32.totalorder %s25, 0
      %p46 = por %p44, %p45
      %p47 = scmp.ne.s32.totalorder %s33, %s34
      %p48 = scmp.eq.s32.totalorder %s26, 1
      %p49 = por %p47, %p48
      %p51 = scmp.ne.s32.totalorder %s34, %s50
      %p52 = scmp.eq.s32.totalorder %s26, 0
      %p53 = por %p51, %p52
      %s55 = sadd.s32 %s54, 1
      %p58 = scmp.eq.s32.totalorder %s20, 1
      %p59 = scmp.ne.s32.totalorder %s54, %s56
      %p60 = scmp.eq.s32.totalorder %s20, 0
      %p61 = por %p59, %p60
      %p62 = scmp.ne.s32.totalorder %s54, %s56
      %p63 = scmp.eq.s32.totalorder %s25, 1
      %p64 = por %p62, %p63
      %p65 = scmp.ne.s32.totalorder %s56, %s57
      %p66 = scmp.eq.s32.totalorder %s25, 0
      %p67 = por %p65, %p66
      %p68 = scmp.ne.s32.totalorder %s56, %s57
      %p69 = scmp.eq.s32.totalorder %s26, 1
      %p70 = por %p68, %p69
      %p72 = scmp.ne.s32.totalorder %s57, %s71
      %p73 = scmp.eq.s32.totalorder %s26, 0
      %p74 = por %p72, %p73
      %s75 = ssub.s32 %s20, %s27
      %p76 = scmp.eq.s32.totalorder %s75, 0
      %s78 = sadd.s32 %s77, 1
      %s79 = scalar_select %p76, %s77, %s78
      %p82 = pneg %p76
      %p83 = scmp.eq.s32.totalorder %s20, 1
      %p84 = por %p82, %p83
      %p85 = scmp.ne.s32.totalorder %s77, %s80
      %p86 = scmp.eq.s32.totalorder %s20, 0
      %p87 = por %p85, %p86
      %p88 = scmp.ne.s32.totalorder %s77, %s80
      %p89 = scmp.eq.s32.totalorder %s25, 1
      %p90 = por %p88, %p89
      %p91 = scmp.ne.s32.totalorder %s80, %s81
      %p92 = scmp.eq.s32.totalorder %s25, 0
      %p93 = por %p91, %p92
      %p94 = scmp.ne.s32.totalorder %s80, %s81
      %p95 = scmp.eq.s32.totalorder %s26, 1
      %p96 = por %p94, %p95
      %p98 = scmp.ne.s32.totalorder %s81, %s97
      %p99 = scmp.eq.s32.totalorder %s26, 0
      %p100 = por %p98, %p99
      %s101 = ssub.s32 %s20, %s27
      %p102 = scmp.eq.s32.totalorder %s101, 0
      %s104 = sadd.s32 %s103, 1
      %s105 = scalar_select %p102, %s103, %s104
      %p108 = pneg %p102
      %p109 = scmp.eq.s32.totalorder %s20, 1
      %p110 = por %p108, %p109
      %p111 = scmp.ne.s32.totalorder %s103, %s106
      %p112 = scmp.eq.s32.totalorder %s20, 0
      %p113 = por %p111, %p112
      %p114 = scmp.ne.s32.totalorder %s103, %s106
      %p115 = scmp.eq.s32.totalorder %s25, 1
      %p116 = por %p114, %p115
      %p117 = scmp.ne.s32.totalorder %s106, %s107
      %p118 = scmp.eq.s32.totalorder %s25, 0
      %p119 = por %p117, %p118
      %p120 = scmp.ne.s32.totalorder %s106, %s107
      %p121 = scmp.eq.s32.totalorder %s26, 1
      %p122 = por %p120, %p121
      %p124 = scmp.ne.s32.totalorder %s107, %s123
      %p125 = scmp.eq.s32.totalorder %s26, 0
      %p126 = por %p124, %p125
      %p127 = scmp.le.s32.totalorder 1, %s20
      %p128 = scmp.lt.s32.totalorder %s20, 3
      %p129 = pnand %p127, %p128
      %p130 = pneg %p129
      // Predicated region
      $region9: #{tpu_custom_call.1} parent=5 // pred_check
        _
      $region10: #{tpu_custom_call.1} parent=5 // pred_check_branch
        %132 = sbr.rel (%p129) target = $region12
      $region11: #{tpu_custom_call.1} parent=5 // pred_region
        %s133 = ssub.s32 %s20, 1
        // Predicated region
        $region13: #{tpu_custom_call.1} parent=11 // pred_check
          %p134 = pneg %p67
        $region14: #{tpu_custom_call.1} parent=11 // pred_check_branch
          %136 = sbr.rel (%p134) target = $region16
        $region15: #{tpu_custom_call.1} parent=11 // pred_region
          %s138 = ssub.s32 5376, 5376
          %139 = vsyncadd [#allocation6], %s138
          %s140 = sshll.u32 [#allocation5], 4
          %s141 = int_to_ptr.vmem [resolvable:$true] %s140
          %146 = dma.hbm_to_vmem [thread:$0]  %s1, 5376, %s141, [#allocation6], 128, 128, 8
        $region16: #{tpu_custom_call.1} parent=11 // pred_fallthru
          _
      $region12: #{tpu_custom_call.1} parent=5 // pred_fallthru
        _
      %p147 = scmp.lt.s32.totalorder %s20, 2
      // Predicated region
      $region17: #{tpu_custom_call.1} parent=5 // pred_check
        %p148 = pneg %p147
      $region18: #{tpu_custom_call.1} parent=5 // pred_check_branch
        %150 = sbr.rel (%p148) target = $region20
      $region19: #{tpu_custom_call.1} parent=5 // pred_region
        // Predicated region
        $region21: #{tpu_custom_call.1} parent=19 // pred_check
          %p151 = pneg %p40
        $region22: #{tpu_custom_call.1} parent=19 // pred_check_branch
          %153 = sbr.rel (%p151) target = $region24
        $region23: #{tpu_custom_call.1} parent=19 // pred_region
          %s154 = sand.u32 %s30, 1
          %s155 = scalar_lea.sflag [#allocation3], %s154
          %s156 = sand.u32 %s30, 1
          %s157 = smul.addr %s156, 48
          %s158 = scalar_lea.vmem [#allocation2], %s157
          %s159 = smul.u32 2, %s20
          %s161 = ssub.s32 768, 768
          %162 = vsyncadd %s155, %s161
          %s163 = smul.addr %s159, 3
          %s164 = smul.addr %s163, 128
          %s165 = scalar_lea.hbm %s0, %s164
          %s166 = sshll.u32 %s158, 4
          %s167 = int_to_ptr.vmem [resolvable:$true] %s166
          %172 = dma.hbm_to_vmem [thread:$0]  %s165, 768, %s167, %s155, 384, 384, 24
        $region24: #{tpu_custom_call.1} parent=19 // pred_fallthru
          _
      $region20: #{tpu_custom_call.1} parent=5 // pred_fallthru
        _
      %p173 = scmp.le.s32.totalorder 1, %s20
      %p174 = scmp.lt.s32.totalorder %s20, 3
      %p175 = pnand %p173, %p174
      %p176 = pneg %p175
      // Predicated region
      $region25: #{tpu_custom_call.1} parent=5 // pred_check
        _
      $region26: #{tpu_custom_call.1} parent=5 // pred_check_branch
        %178 = sbr.rel (%p175) target = $region28
      $region27: #{tpu_custom_call.1} parent=5 // pred_region
        %s179 = ssub.s32 %s20, 1
        %s180 = sand.u32 %s33, 1
        %s181 = scalar_lea.sflag [#allocation3], %s180
        %s182 = sand.u32 %s33, 1
        %s183 = smul.addr %s182, 48
        %s184 = scalar_lea.vmem [#allocation2], %s183
        // Predicated region
        $region29: #{tpu_custom_call.1} parent=27 // pred_check
          %p185 = pneg %p46
        $region30: #{tpu_custom_call.1} parent=27 // pred_check_branch
          %187 = sbr.rel (%p185) target = $region32
        $region31: #{tpu_custom_call.1} parent=27 // pred_region
          %188 = dma.done %s181, 768
        $region32: #{tpu_custom_call.1} parent=27 // pred_fallthru
          _
        // Predicated region
        $region33: #{tpu_custom_call.1} parent=27 // pred_check
          %p189 = pneg %p67
        $region34: #{tpu_custom_call.1} parent=27 // pred_check_branch
          %191 = sbr.rel (%p189) target = $region36
        $region35: #{tpu_custom_call.1} parent=27 // pred_region
          %192 = dma.done [#allocation6], 5376
        $region36: #{tpu_custom_call.1} parent=27 // pred_fallthru
          _
        %s193 = sand.u32 %s33, 1
        %s194 = scalar_lea.sflag [#allocation3], %s193
        %s195 = sand.u32 %s33, 1
        %s196 = smul.addr %s195, 48
        %s197 = scalar_lea.vmem [#allocation2], %s196
        %p198 = pneg %p46
        %p199 = pneg %p43
        %p200 = pneg %p67
        %p201 = pneg %p64
        %p202 = pneg %p93
        %p203 = pneg %p90
        %s204 = sand.u32 %s80, 1
        %s205 = scalar_lea.sflag [#allocation4], %s204
        %s206 = sand.u32 %s80, 1
        %s207 = smul.addr %s206, 16
        %s208 = scalar_lea.vmem [#allocation7], %s207
        %p209 = pneg %p119
        %p210 = pneg %p116
        %s211 = sand.u32 %s106, 1
        %s212 = scalar_lea.sflag [#allocation9], %s211
        %s213 = sand.u32 %s106, 1
        %s214 = smul.addr %s213, 2
        %s215 = scalar_lea.vmem [#allocation8], %s214
        %s216 = smul.u32 2, %s25
        %s217 = smul.u32 2, %s25
        %v218 = vld [vmem:[%s184] sm:$0xff]
        %v219 = vld [vmem:[%s184 + $0x8] sm:$0xff]
        %v220 = vld [vmem:[%s184 + $0x10] sm:$0xff]
        %v221 = vld [vmem:[%s184 + $0x18] sm:$0xff]
        %v222 = vld [vmem:[%s184 + $0x20] sm:$0xff]
        %v223 = vld [vmem:[%s184 + $0x28] sm:$0xff]
        %v224 = vld [vmem:[#allocation5] sm:$0xff]
        %v225 = vld [vmem:[#allocation5 + $0x8] sm:$0xff]
        %v226 = vld [vmem:[#allocation5 + $0x10] sm:$0xff]
        %v227 = vld [vmem:[#allocation5 + $0x18] sm:$0xff]
        %v228 = vld [vmem:[#allocation5 + $0x20] sm:$0xff]
        %v229 = vld [vmem:[#allocation5 + $0x28] sm:$0xff]
        %v230 = vld [vmem:[#allocation5 + $0x30] sm:$0xff]
        %v231 = vld [vmem:[#allocation5 + $0x38] sm:$0xff]
        %v232 = vld [vmem:[#allocation5 + $0x40] sm:$0xff]
        %v233 = vld [vmem:[#allocation5 + $0x48] sm:$0xff]
        %v234 = vld [vmem:[#allocation5 + $0x50] sm:$0xff]
        %v235 = vld [vmem:[#allocation5 + $0x58] sm:$0xff]
        %v236 = vld [vmem:[#allocation5 + $0x60] sm:$0xff]
        %v237 = vld [vmem:[#allocation5 + $0x68] sm:$0xff]
        %v238 = vld [vmem:[#allocation5 + $0x70] sm:$0xff]
        %v239 = vld [vmem:[#allocation5 + $0x78] sm:$0xff]
        %v240 = vld [vmem:[#allocation5 + $0x80] sm:$0xff]
        %v241 = vld [vmem:[#allocation5 + $0x88] sm:$0xff]
        %v242 = vld [vmem:[#allocation5 + $0x90] sm:$0xff]
        %v243 = vld [vmem:[#allocation5 + $0x98] sm:$0xff]
        %v244 = vld [vmem:[#allocation5 + $0xa0] sm:$0xff]
        %v245 = vld [vmem:[#allocation5 + $0xa8] sm:$0xff]
        %v246 = vld [vmem:[#allocation5 + $0xb0] sm:$0xff]
        %v247 = vld [vmem:[#allocation5 + $0xb8] sm:$0xff]
        %v248 = vld [vmem:[#allocation5 + $0xc0] sm:$0xff]
        %v249 = vld [vmem:[#allocation5 + $0xc8] sm:$0xff]
        %v250 = vld [vmem:[#allocation5 + $0xd0] sm:$0xff]
        %v251 = vld [vmem:[#allocation5 + $0xd8] sm:$0xff]
        %v252 = vld [vmem:[#allocation5 + $0xe0] sm:$0xff]
        %v253 = vld [vmem:[#allocation5 + $0xe8] sm:$0xff]
        %v254 = vld [vmem:[#allocation5 + $0xf0] sm:$0xff]
        %v255 = vld [vmem:[#allocation5 + $0xf8] sm:$0xff]
        %v256 = vld [vmem:[#allocation5 + $0x100] sm:$0xff]
        %v257 = vld [vmem:[#allocation5 + $0x108] sm:$0xff]
        %v258 = vld [vmem:[#allocation5 + $0x110] sm:$0xff]
        %v259 = vld [vmem:[#allocation5 + $0x118] sm:$0xff]
        %v260 = vld [vmem:[#allocation5 + $0x120] sm:$0xff]
        %v261 = vld [vmem:[#allocation5 + $0x128] sm:$0xff]
        %v262 = vld [vmem:[#allocation5 + $0x130] sm:$0xff]
        %v263 = vld [vmem:[#allocation5 + $0x138] sm:$0xff]
        %v264 = vld [vmem:[#allocation5 + $0x140] sm:$0xff]
        %v265 = vld [vmem:[#allocation5 + $0x148] sm:$0xff]
        %vm266 = vcmask 654336
        %v268 = vsel %vm266, %v220, 0
        %v271 = vsel %vm266, %v223, 0
        %273 = vmatprep.subr.mxu0 0.0
        %274 = vmatpush1.msra.mxu0 %v239
        %275 = vmatprep.subr.mxu0 0.0
        %276 = vmatpush1.msra.mxu0 %v238
        %277 = vmatprep.subr.mxu0 0.0
        %278 = vmatpush1.msra.mxu0 %v237
        %279 = vmatprep.subr.mxu0 0.0
        %280 = vmatpush1.msra.mxu0 %v236
        %281 = vmatprep.subr.mxu0 0.0
        %282 = vmatpush1.msra.mxu0 %v235
        %283 = vmatprep.subr.mxu0 0.0
        %284 = vmatpush1.msra.mxu0 %v234
        %285 = vmatprep.subr.mxu0 0.0
        %286 = vmatpush1.msra.mxu0 %v233
        %287 = vmatprep.subr.mxu0 0.0
        %288 = vmatpush1.msra.mxu0 %v232
        %289 = vmatprep.subr.mxu0 0.0
        %290 = vmatpush1.msra.mxu0 %v231
        %291 = vmatprep.subr.mxu0 0.0
        %292 = vmatpush1.msra.mxu0 %v230
        %293 = vmatprep.subr.mxu0 0.0
        %294 = vmatpush1.msra.mxu0 %v229
        %295 = vmatprep.subr.mxu0 0.0
        %296 = vmatpush1.msra.mxu0 %v228
        %297 = vmatprep.subr.mxu0 0.0
        %298 = vmatpush1.msra.mxu0 %v227
        %299 = vmatprep.subr.mxu0 0.0
        %300 = vmatpush1.msra.mxu0 %v226
        %301 = vmatprep.subr.mxu0 0.0
        %302 = vmatpush1.msra.mxu0 %v225
        %303 = vmatprep.subr.mxu0 0.0
        %304 = vmatpush1.msra.mxu0 %v224
        %305 = vmatprep.subr.mxu0 0.0
        %306 = vmatpush2.msra.mxu0 %v255
        %307 = vmatprep.subr.mxu0 0.0
        %308 = vmatpush2.msra.mxu0 %v254
        %309 = vmatprep.subr.mxu0 0.0
        %310 = vmatpush2.msra.mxu0 %v253
        %311 = vmatprep.subr.mxu0 0.0
        %312 = vmatpush2.msra.mxu0 %v252
        %313 = vmatprep.subr.mxu0 0.0
        %314 = vmatpush2.msra.mxu0 %v251
        %315 = vmatprep.subr.mxu0 0.0
        %316 = vmatpush2.msra.mxu0 %v250
        %317 = vmatprep.subr.mxu0 0.0
        %318 = vmatpush2.msra.mxu0 %v249
        %319 = vmatprep.subr.mxu0 0.0
        %320 = vmatpush2.msra.mxu0 %v248
        %321 = vmatprep.subr.mxu0 0.0
        %322 = vmatpush2.msra.mxu0 %v247
        %323 = vmatprep.subr.mxu0 0.0
        %324 = vmatpush2.msra.mxu0 %v246
        %325 = vmatprep.subr.mxu0 0.0
        %326 = vmatpush2.msra.mxu0 %v245
        %327 = vmatprep.subr.mxu0 0.0
        %328 = vmatpush2.msra.mxu0 %v244
        %329 = vmatprep.subr.mxu0 0.0
        %330 = vmatpush2.msra.mxu0 %v243
        %331 = vmatprep.subr.mxu0 0.0
        %332 = vmatpush2.msra.mxu0 %v242
        %333 = vmatprep.subr.mxu0 0.0
        %334 = vmatpush2.msra.mxu0 %v241
        %335 = vmatprep.subr.mxu0 0.0
        %336 = vmatpush2.msra.mxu0 %v240
        %337 = vmatprep.mubr.f32.mxu0 %v219
        %338 = vmatmul.mubr.f32.gmra.mxu0 %v218
        %v339 = vpop.f32.mrf.mxu0
        %v340 = vadd.f32 0.0, %v339
        %v341 = vpop.f32.mrf.mxu0
        %342 = vmatprep.mubr.f32.mxu0 %v222
        %343 = vmatmul.mubr.f32.gmra.mxu0 %v221
        %v344 = vpop.f32.mrf.mxu0
        %v345 = vadd.f32 0.0, %v344
        %v346 = vpop.f32.mrf.mxu0
        %347 = vdwg.mxu0
        %348 = vmatprep.subr.mxu0 0.0
        %349 = vmatpush1.msra.mxu0 0.0
        %350 = vmatprep.subr.mxu0 0.0
        %351 = vmatpush1.msra.mxu0 0.0
        %352 = vmatprep.subr.mxu0 0.0
        %353 = vmatpush1.msra.mxu0 0.0
        %354 = vmatprep.subr.mxu0 0.0
        %355 = vmatpush1.msra.mxu0 0.0
        %356 = vmatprep.subr.mxu0 0.0
        %357 = vmatpush1.msra.mxu0 0.0
        %358 = vmatprep.subr.mxu0 0.0
        %359 = vmatpush1.msra.mxu0 0.0
        %360 = vmatprep.subr.mxu0 0.0
        %361 = vmatpush1.msra.mxu0 %v265
        %362 = vmatprep.subr.mxu0 0.0
        %363 = vmatpush1.msra.mxu0 %v264
        %364 = vmatprep.subr.mxu0 0.0
        %365 = vmatpush1.msra.mxu0 %v263
        %366 = vmatprep.subr.mxu0 0.0
        %367 = vmatpush1.msra.mxu0 %v262
        %368 = vmatprep.subr.mxu0 0.0
        %369 = vmatpush1.msra.mxu0 %v261
        %370 = vmatprep.subr.mxu0 0.0
        %371 = vmatpush1.msra.mxu0 %v260
        %372 = vmatprep.subr.mxu0 0.0
        %373 = vmatpush1.msra.mxu0 %v259
        %374 = vmatprep.subr.mxu0 0.0
        %375 = vmatpush1.msra.mxu0 %v258
        %376 = vmatprep.subr.mxu0 0.0
        %377 = vmatpush1.msra.mxu0 %v257
        %378 = vmatprep.subr.mxu0 0.0
        %379 = vmatpush1.msra.mxu0 %v256
        %380 = vmatprep.subr.mxu0 0.0
        %381 = vmatpush2.msra.mxu0 0.0
        %382 = vmatprep.subr.mxu0 0.0
        %383 = vmatpush2.msra.mxu0 0.0
        %384 = vmatprep.subr.mxu0 0.0
        %385 = vmatpush2.msra.mxu0 0.0
        %386 = vmatprep.subr.mxu0 0.0
        %387 = vmatpush2.msra.mxu0 0.0
        %388 = vmatprep.subr.mxu0 0.0
        %389 = vmatpush2.msra.mxu0 0.0
        %390 = vmatprep.subr.mxu0 0.0
        %391 = vmatpush2.msra.mxu0 0.0
        %392 = vmatprep.subr.mxu0 0.0
        %393 = vmatpush2.msra.mxu0 0.0
        %394 = vmatprep.subr.mxu0 0.0
        %395 = vmatpush2.msra.mxu0 0.0
        %396 = vmatprep.subr.mxu0 0.0
        %397 = vmatpush2.msra.mxu0 0.0
        %398 = vmatprep.subr.mxu0 0.0
        %399 = vmatpush2.msra.mxu0 0.0
        %400 = vmatprep.subr.mxu0 0.0
        %401 = vmatpush2.msra.mxu0 0.0
        %402 = vmatprep.subr.mxu0 0.0
        %403 = vmatpush2.msra.mxu0 0.0
        %404 = vmatprep.subr.mxu0 0.0
        %405 = vmatpush2.msra.mxu0 0.0
        %406 = vmatprep.subr.mxu0 0.0
        %407 = vmatpush2.msra.mxu0 0.0
        %408 = vmatprep.subr.mxu0 0.0
        %409 = vmatpush2.msra.mxu0 0.0
        %410 = vmatprep.subr.mxu0 0.0
        %411 = vmatpush2.msra.mxu0 0.0
        %412 = vmatprep.mubr.f32.mxu0 0.0
        %413 = vmatmul.mubr.f32.gmra.mxu0 %v268
        %v414 = vpop.f32.mrf.mxu0
        %v415 = vadd.f32 %v340, %v414
        %v416 = vpop.f32.mrf.mxu0
        %417 = vmatprep.mubr.f32.mxu0 0.0
        %418 = vmatmul.mubr.f32.gmra.mxu0 %v271
        %v419 = vpop.f32.mrf.mxu0
        %v420 = vadd.f32 %v345, %v419
        %v421 = vpop.f32.mrf.mxu0
        %422 = vdwg.mxu0
        %v423 = vadd.f32 %v415, %v420
        %v424 = vrot.slane %v423, 4
        %v425 = vadd.f32 %v423, %v424
        %v426 = vrot.slane %v425, 2
        %v427 = vadd.f32 %v425, %v426
        %v428 = vrot.slane %v427, 1
        %v429 = vadd.f32 %v427, %v428
        %v430 = vmul.f32 %v415, %v415
        %v431 = vmul.f32 %v420, %v420
        %v432 = vadd.f32 %v430, %v431
        %v433 = vrot.slane %v432, 4
        %v434 = vadd.f32 %v432, %v433
        %v435 = vrot.slane %v434, 2
        %v436 = vadd.f32 %v434, %v435
        %v437 = vrot.slane %v436, 1
        %v438 = vadd.f32 %v436, %v437
        %vm439 = vcmask 1040384
        %v440 = vsel %vm439, %v429, %v438
        %441 = vst [vmem:[%s215] sm:$0x3] %v440
        %442 = vst [vmem:[%s208] sm:$0xff] %v415
        %443 = vst [vmem:[%s208 + $0x8] sm:$0xff] %v420
        %s444 = sand.u32 %s80, 1
        %s445 = scalar_lea.sflag [#allocation4], %s444
        %s446 = sand.u32 %s80, 1
        %s447 = smul.addr %s446, 16
        %s448 = scalar_lea.vmem [#allocation7], %s447
        %s449 = sand.u32 %s106, 1
        %s450 = scalar_lea.sflag [#allocation9], %s449
        %s451 = sand.u32 %s106, 1
        %s452 = smul.addr %s451, 2
        %s453 = scalar_lea.vmem [#allocation8], %s452
        // Predicated region
        $region37: #{tpu_custom_call.1} parent=27 // pred_check
          %p454 = pneg %p90
        $region38: #{tpu_custom_call.1} parent=27 // pred_check_branch
          %456 = sbr.rel (%p454) target = $region40
        $region39: #{tpu_custom_call.1} parent=27 // pred_region
          %s457 = smul.u32 2, %s25
          %s459 = ssub.s32 256, 256
          %460 = vsyncadd %s445, %s459
          %s461 = smul.addr %s457, 128
          %s462 = scalar_lea.hbm %s2, %s461
          %s463 = sshll.u32 %s448, 4
          %s464 = int_to_ptr.vmem [resolvable:$true] %s463
          %469 = dma.vmem_to_hbm [thread:$0]  %s464, 256, %s462, %s445, 128, 128, 8
        $region40: #{tpu_custom_call.1} parent=27 // pred_fallthru
          _
        // Predicated region
        $region41: #{tpu_custom_call.1} parent=27 // pred_check
          %p470 = pneg %p116
        $region42: #{tpu_custom_call.1} parent=27 // pred_check_branch
          %472 = sbr.rel (%p470) target = $region44
        $region43: #{tpu_custom_call.1} parent=27 // pred_region
          %s474 = ssub.s32 32, 32
          %475 = vsyncadd %s450, %s474
          %s476 = smul.addr %s25, 32
          %s477 = scalar_lea.hbm %s3, %s476
          %s479 = sshll.u32 %s453, 4
          %s480 = int_to_ptr.vmem [resolvable:$true] %s479
          %482 = dma.vmem_to_hbm [thread:$0]  %s480, 32, %s477, %s450
        $region44: #{tpu_custom_call.1} parent=27 // pred_fallthru
          _
      $region28: #{tpu_custom_call.1} parent=5 // pred_fallthru
        _
      %p483 = scmp.le.s32.totalorder 2, %s20
      // Predicated region
      $region45: #{tpu_custom_call.1} parent=5 // pred_check
        %p484 = pneg %p483
      $region46: #{tpu_custom_call.1} parent=5 // pred_check_branch
        %486 = sbr.rel (%p484) target = $region48
      $region47: #{tpu_custom_call.1} parent=5 // pred_region
        %s487 = ssub.s32 %s20, 2
        // Predicated region
        $region49: #{tpu_custom_call.1} parent=47 // pred_check
          %p488 = pneg %p96
        $region50: #{tpu_custom_call.1} parent=47 // pred_check_branch
          %490 = sbr.rel (%p488) target = $region52
        $region51: #{tpu_custom_call.1} parent=47 // pred_region
          %s491 = sand.u32 %s81, 1
          %s492 = scalar_lea.sflag [#allocation4], %s491
          %s493 = sand.u32 %s81, 1
          %s494 = smul.addr %s493, 16
          %s495 = scalar_lea.vmem [#allocation7], %s494
          %496 = dma.done %s492, 256
        $region52: #{tpu_custom_call.1} parent=47 // pred_fallthru
          _
        // Predicated region
        $region53: #{tpu_custom_call.1} parent=47 // pred_check
          %p497 = pneg %p122
        $region54: #{tpu_custom_call.1} parent=47 // pred_check_branch
          %499 = sbr.rel (%p497) target = $region56
        $region55: #{tpu_custom_call.1} parent=47 // pred_region
          %s500 = sand.u32 %s107, 1
          %s501 = scalar_lea.sflag [#allocation9], %s500
          %s502 = sand.u32 %s107, 1
          %s503 = smul.addr %s502, 2
          %s504 = scalar_lea.vmem [#allocation8], %s503
          %505 = dma.done %s501, 32
        $region56: #{tpu_custom_call.1} parent=47 // pred_fallthru
          _
      $region48: #{tpu_custom_call.1} parent=5 // pred_fallthru
        _
    $region6: #{tpu_custom_call.1} parent=1 // loop_footer
      %s24 = sadd.s32 1, %s20
    $region7: #{tpu_custom_call.1} parent=1 // loop_footer_branch
      %19 = sbr.rel target = $region3
    $region8: #{tpu_custom_call.1} parent=1 // loop_exit
      _
    %506 = vsyncpa [#allocation3], 1
    %s507 = scalar_lea.sflag [#allocation3], 1
    %508 = vsyncpa %s507, 1
    %509 = vsyncpa [#allocation6], 1
    %510 = vsyncpa [#allocation4], 1
    %s511 = scalar_lea.sflag [#allocation4], 1
    %512 = vsyncpa %s511, 1
    %513 = vsyncpa [#allocation9], 1
    %s514 = scalar_lea.sflag [#allocation9], 1
    %515 = vsyncpa %s514, 1

</llo_original>
